<compile_context>
chip_gen: v6e
topology: v6e:2x2x1
jax: 0.10.0
libtpu: 0.0.40
codegen_flags: <defaults>
</compile_context>

<pallas_src>
import jax
import jax.numpy as jnp
from jax.experimental import pallas as pl
from jax.experimental.pallas import tpu as pltpu


def _round_up(x, m):
    return (x + m - 1) // m * m


def embedding_kernel(xw_ref, xc_ref, wpw_ref, wpc_ref,
                     wt1_ref, bt1_ref, wg1_ref, bg1_ref,
                     wt2_ref, bt2_ref, wg2_ref, bg2_ref, out_ref):
    # xw_ref: (TN, Dw), xc_ref: (TN, 16*Dc); weights are full, pre-transposed
    # to (in_features, H); biases are (1, H); out_ref: (TN, H).
    xw = xw_ref[...]
    xc = xc_ref[...]

    # cat(word, char) @ Wp.T  ==  word @ Wp[:, :Dw].T + char @ Wp[:, Dw:].T
    h = (jnp.dot(xw, wpw_ref[...], preferred_element_type=jnp.float32)
         + jnp.dot(xc, wpc_ref[...], preferred_element_type=jnp.float32))   # (TN, H)

    def highway(x, wt, bt, wg, bg):
        t = jnp.maximum(jnp.dot(x, wt, preferred_element_type=jnp.float32) + bt, 0.0)
        z = jnp.dot(x, wg, preferred_element_type=jnp.float32) + bg
        g = 1.0 / (1.0 + jnp.exp(-z))            # sigmoid (exp on EUP slot)
        return g * t + (1.0 - g) * x

    h = highway(h, wt1_ref[...], bt1_ref[...], wg1_ref[...], bg1_ref[...])
    h = highway(h, wt2_ref[...], bt2_ref[...], wg2_ref[...], bg2_ref[...])

    out_ref[...] = h.astype(out_ref.dtype)


def qanet_embedding(w_idx, c_idx, word_vectors, char_vectors, w_proj,
                    w_t1, b_t1, w_g1, b_g1, w_t2, b_t2, w_g2, b_g2,
                    *, block_rows=128):
    """Forward pass of the QANet `Embedding` module (eval mode).

    w_idx: (B, L) int32, c_idx: (B, L, CHAR_LIMIT) int32.
    word_vectors: (Vw, Dw), char_vectors: (Vc, Dc).
    w_proj: (H, Dw + CHAR_LIMIT*Dc) (Linear, no bias).
    w_t*/b_t*, w_g*/b_g*: highway transform/gate Linear(H, H) params.
    Returns (B, L, H) float32.
    """
    B, L = w_idx.shape
    Dw = word_vectors.shape[1]
    Dc = char_vectors.shape[1]
    C = c_idx.shape[2]
    H = w_proj.shape[0]

    # Embedding lookups are HBM gathers; do them in plain JAX (XLA gather).
    # A per-row Pallas DMA gather would reintroduce the tiny-block /
    # per-grid-step-overhead pattern the perf review flagged.
    word_emb = jnp.take(word_vectors, w_idx, axis=0)            # (B, L, Dw)
    char_emb = jnp.take(char_vectors, c_idx, axis=0)            # (B, L, C, Dc)
    char_flat = char_emb.reshape(B, L, C * Dc)                  # (B, L, C*Dc)

    # Flatten (B, L) into rows; keep feature dims trailing (no transposes).
    N = B * L
    xw = word_emb.reshape(N, Dw)
    xc = char_flat.reshape(N, C * Dc)

    # >=8 rows per grid step; pad rows so the grid divides evenly.
    tn = min(block_rows, _round_up(N, 8))
    n_pad = _round_up(N, tn)
    if n_pad != N:
        xw = jnp.pad(xw, ((0, n_pad - N), (0, 0)))
        xc = jnp.pad(xc, ((0, n_pad - N), (0, 0)))

    # Pre-split / pre-transpose weights wrapper-side (tiny tensors), so the
    # kernel never slices or transposes weights per grid step.
    wpw = jnp.asarray(w_proj[:, :Dw].T)                         # (Dw, H)
    wpc = jnp.asarray(w_proj[:, Dw:].T)                         # (C*Dc, H)
    wt1 = w_t1.T
    wg1 = w_g1.T
    wt2 = w_t2.T
    wg2 = w_g2.T
    bt1 = b_t1.reshape(1, H)
    bg1 = b_g1.reshape(1, H)
    bt2 = b_t2.reshape(1, H)
    bg2 = b_g2.reshape(1, H)

    def row_spec(d):
        return pl.BlockSpec((tn, d), lambda i: (i, 0))

    def full_spec(a):
        return pl.BlockSpec(a.shape, lambda i: (0,) * a.ndim)

    out = pl.pallas_call(
        embedding_kernel,
        out_shape=jax.ShapeDtypeStruct((n_pad, H), jnp.float32),
        grid=(n_pad // tn,),
        in_specs=[row_spec(Dw), row_spec(C * Dc),
                  full_spec(wpw), full_spec(wpc),
                  full_spec(wt1), full_spec(bt1), full_spec(wg1), full_spec(bg1),
                  full_spec(wt2), full_spec(bt2), full_spec(wg2), full_spec(bg2)],
        out_specs=pl.BlockSpec((tn, H), lambda i: (i, 0)),
        compiler_params=pltpu.CompilerParams(
            dimension_semantics=("parallel",)),
    )(xw, xc, wpw, wpc, wt1, bt1, wg1, bg1, wt2, bt2, wg2, bg2)

    return out[:N].reshape(B, L, H)


def _reference(w_idx, c_idx, word_vectors, char_vectors, w_proj,
               w_t1, b_t1, w_g1, b_g1, w_t2, b_t2, w_g2, b_g2):
    """Pure-JAX reference mirroring the PyTorch forward (eval mode)."""
    B, L = w_idx.shape
    with jax.default_matmul_precision("float32"):
        word_emb = word_vectors[w_idx]
        char_emb = char_vectors[c_idx].reshape(B, L, -1)
        emb = jnp.concatenate([word_emb, char_emb], axis=2)
        x = emb @ w_proj.T
        for wt, bt, wg, bg in ((w_t1, b_t1, w_g1, b_g1),
                               (w_t2, b_t2, w_g2, b_g2)):
            g = jax.nn.sigmoid(x @ wg.T + bg)
            t = jax.nn.relu(x @ wt.T + bt)
            x = g * t + (1.0 - g) * x
    return x


if __name__ == "__main__":
    B, L = 2, 16
    CHAR_LIMIT = 16
    word_vocab, word_dim = 50, 32
    char_vocab, char_dim = 40, 8
    hidden = 32
    emb_dim = word_dim + CHAR_LIMIT * char_dim

    key = jax.random.PRNGKey(0)
    keys = jax.random.split(key, 9)

    word_vectors = jax.random.normal(keys[0], (word_vocab, word_dim), jnp.float32)
    char_vectors = jax.random.normal(keys[1], (char_vocab, char_dim), jnp.float32)
    char_vectors = char_vectors.at[0].set(0.0)        # padding_idx=0 row is zero

    w_idx = jax.random.randint(keys[2], (B, L), 0, word_vocab, dtype=jnp.int32)
    c_idx = jax.random.randint(keys[3], (B, L, CHAR_LIMIT), 0, char_vocab,
                               dtype=jnp.int32)

    def linear_init(k, out_f, in_f, bias=True):
        bound = 1.0 / (in_f ** 0.5)                   # PyTorch-default-style init
        kw, kb = jax.random.split(k)
        w = jax.random.uniform(kw, (out_f, in_f), jnp.float32, -bound, bound)
        if not bias:
            return w
        b = jax.random.uniform(kb, (out_f,), jnp.float32, -bound, bound)
        return w, b

    w_proj = linear_init(keys[4], hidden, emb_dim, bias=False)   # Conv1dLinear, no bias
    w_t1, b_t1 = linear_init(keys[5], hidden, hidden)
    w_g1, b_g1 = linear_init(keys[6], hidden, hidden)
    w_t2, b_t2 = linear_init(keys[7], hidden, hidden)
    w_g2, b_g2 = linear_init(keys[8], hidden, hidden)

    out = qanet_embedding(w_idx, c_idx, word_vectors, char_vectors, w_proj,
                          w_t1, b_t1, w_g1, b_g1, w_t2, b_t2, w_g2, b_g2)
    jax.block_until_ready(out)

    ref = _reference(w_idx, c_idx, word_vectors, char_vectors, w_proj,
                     w_t1, b_t1, w_g1, b_g1, w_t2, b_t2, w_g2, b_g2)

    assert out.shape == (B, L, hidden)
    assert jnp.allclose(out, ref, atol=1e-3, rtol=1e-3), \
        float(jnp.max(jnp.abs(out - ref)))

    print("KERNEL_OK")
</pallas_src>

<mosaic_0001>
module attributes {stable_mosaic.version = 11 : i64} {
  func.func @embedding_kernel(%arg0: i32, %arg1: memref<32x32xf32, #tpu.memory_space<vmem>>, %arg2: memref<32x128xf32, #tpu.memory_space<vmem>>, %arg3: memref<32x32xf32, #tpu.memory_space<vmem>>, %arg4: memref<128x32xf32, #tpu.memory_space<vmem>>, %arg5: memref<32x32xf32, #tpu.memory_space<vmem>>, %arg6: memref<1x32xf32, #tpu.memory_space<vmem>>, %arg7: memref<32x32xf32, #tpu.memory_space<vmem>>, %arg8: memref<1x32xf32, #tpu.memory_space<vmem>>, %arg9: memref<32x32xf32, #tpu.memory_space<vmem>>, %arg10: memref<1x32xf32, #tpu.memory_space<vmem>>, %arg11: memref<32x32xf32, #tpu.memory_space<vmem>>, %arg12: memref<1x32xf32, #tpu.memory_space<vmem>>, %arg13: memref<32x32xf32, #tpu.memory_space<vmem>>) attributes {dimension_semantics = [#tpu.dimension_semantics<parallel>], iteration_bounds = array<i64: 1>, scalar_prefetch = 0 : i64, scratch_operands = 0 : i64, tpu.core_type = #tpu.core_type<tc>, window_params = [{transform_indices = @transform_0, window_bounds = array<i64: 32, 32>}, {transform_indices = @transform_1, window_bounds = array<i64: 32, 128>}, {pipeline_mode = #tpu.pipeline_mode<synchronous>, transform_indices = @transform_2, window_bounds = array<i64: 32, 32>}, {pipeline_mode = #tpu.pipeline_mode<synchronous>, transform_indices = @transform_3, window_bounds = array<i64: 128, 32>}, {pipeline_mode = #tpu.pipeline_mode<synchronous>, transform_indices = @transform_4, window_bounds = array<i64: 32, 32>}, {pipeline_mode = #tpu.pipeline_mode<synchronous>, transform_indices = @transform_5, window_bounds = array<i64: 1, 32>}, {pipeline_mode = #tpu.pipeline_mode<synchronous>, transform_indices = @transform_6, window_bounds = array<i64: 32, 32>}, {pipeline_mode = #tpu.pipeline_mode<synchronous>, transform_indices = @transform_7, window_bounds = array<i64: 1, 32>}, {pipeline_mode = #tpu.pipeline_mode<synchronous>, transform_indices = @transform_8, window_bounds = array<i64: 32, 32>}, {pipeline_mode = #tpu.pipeline_mode<synchronous>, transform_indices = @transform_9, window_bounds = array<i64: 1, 32>}, {pipeline_mode = #tpu.pipeline_mode<synchronous>, transform_indices = @transform_10, window_bounds = array<i64: 32, 32>}, {pipeline_mode = #tpu.pipeline_mode<synchronous>, transform_indices = @transform_11, window_bounds = array<i64: 1, 32>}, {transform_indices = @transform_12, window_bounds = array<i64: 32, 32>}]} {
    %c0 = arith.constant 0 : index
    %c0_0 = arith.constant 0 : index
    %0 = vector.load %arg1[%c0, %c0_0] : memref<32x32xf32, #tpu.memory_space<vmem>>, vector<32x32xf32>
    %c0_1 = arith.constant 0 : index
    %c0_2 = arith.constant 0 : index
    %1 = vector.load %arg2[%c0_1, %c0_2] : memref<32x128xf32, #tpu.memory_space<vmem>>, vector<32x128xf32>
    %c0_3 = arith.constant 0 : index
    %c0_4 = arith.constant 0 : index
    %2 = vector.load %arg3[%c0_3, %c0_4] : memref<32x32xf32, #tpu.memory_space<vmem>>, vector<32x32xf32>
    %cst = arith.constant dense<0.000000e+00> : vector<32x32xf32>
    %3 = tpu.matmul %0, %2, %cst {dimension_numbers = #tpu.dot_dimension_numbers<[1], [0], [0], [1], [0, 0, 1, 1], [], []>} : vector<32x32xf32>, vector<32x32xf32>, vector<32x32xf32> -> vector<32x32xf32>
    %c0_5 = arith.constant 0 : index
    %c0_6 = arith.constant 0 : index
    %4 = vector.load %arg4[%c0_5, %c0_6] : memref<128x32xf32, #tpu.memory_space<vmem>>, vector<128x32xf32>
    %cst_7 = arith.constant dense<0.000000e+00> : vector<32x32xf32>
    %5 = tpu.matmul %1, %4, %cst_7 {dimension_numbers = #tpu.dot_dimension_numbers<[1], [0], [0], [1], [0, 0, 1, 1], [], []>} : vector<32x128xf32>, vector<128x32xf32>, vector<32x32xf32> -> vector<32x32xf32>
    %6 = arith.addf %3, %5 : vector<32x32xf32>
    %c0_8 = arith.constant 0 : index
    %c0_9 = arith.constant 0 : index
    %7 = vector.load %arg5[%c0_8, %c0_9] : memref<32x32xf32, #tpu.memory_space<vmem>>, vector<32x32xf32>
    %c0_10 = arith.constant 0 : index
    %c0_11 = arith.constant 0 : index
    %8 = vector.load %arg6[%c0_10, %c0_11] : memref<1x32xf32, #tpu.memory_space<vmem>>, vector<1x32xf32>
    %c0_12 = arith.constant 0 : index
    %c0_13 = arith.constant 0 : index
    %9 = vector.load %arg7[%c0_12, %c0_13] : memref<32x32xf32, #tpu.memory_space<vmem>>, vector<32x32xf32>
    %c0_14 = arith.constant 0 : index
    %c0_15 = arith.constant 0 : index
    %10 = vector.load %arg8[%c0_14, %c0_15] : memref<1x32xf32, #tpu.memory_space<vmem>>, vector<1x32xf32>
    %cst_16 = arith.constant dense<0.000000e+00> : vector<32x32xf32>
    %11 = tpu.matmul %6, %7, %cst_16 {dimension_numbers = #tpu.dot_dimension_numbers<[1], [0], [0], [1], [0, 0, 1, 1], [], []>} : vector<32x32xf32>, vector<32x32xf32>, vector<32x32xf32> -> vector<32x32xf32>
    %12 = vector.broadcast %8 : vector<1x32xf32> to vector<32x32xf32>
    %13 = arith.addf %11, %12 : vector<32x32xf32>
    %cst_17 = arith.constant 0.000000e+00 : f32
    %14 = vector.broadcast %cst_17 : f32 to vector<32x32xf32>
    %15 = arith.maximumf %13, %14 : vector<32x32xf32>
    %cst_18 = arith.constant dense<0.000000e+00> : vector<32x32xf32>
    %16 = tpu.matmul %6, %9, %cst_18 {dimension_numbers = #tpu.dot_dimension_numbers<[1], [0], [0], [1], [0, 0, 1, 1], [], []>} : vector<32x32xf32>, vector<32x32xf32>, vector<32x32xf32> -> vector<32x32xf32>
    %17 = vector.broadcast %10 : vector<1x32xf32> to vector<32x32xf32>
    %18 = arith.addf %16, %17 : vector<32x32xf32>
    %cst_19 = arith.constant 0.000000e+00 : f32
    %19 = vector.broadcast %cst_19 : f32 to vector<32x32xf32>
    %20 = arith.subf %19, %18 : vector<32x32xf32>
    %21 = math.exp %20 : vector<32x32xf32>
    %cst_20 = arith.constant 1.000000e+00 : f32
    %22 = vector.broadcast %cst_20 : f32 to vector<32x32xf32>
    %23 = arith.addf %22, %21 : vector<32x32xf32>
    %cst_21 = arith.constant 1.000000e+00 : f32
    %24 = vector.broadcast %cst_21 : f32 to vector<32x32xf32>
    %25 = arith.divf %24, %23 : vector<32x32xf32>
    %26 = arith.mulf %25, %15 : vector<32x32xf32>
    %cst_22 = arith.constant 1.000000e+00 : f32
    %27 = vector.broadcast %cst_22 : f32 to vector<32x32xf32>
    %28 = arith.subf %27, %25 : vector<32x32xf32>
    %29 = arith.mulf %28, %6 : vector<32x32xf32>
    %30 = arith.addf %26, %29 : vector<32x32xf32>
    %c0_23 = arith.constant 0 : index
    %c0_24 = arith.constant 0 : index
    %31 = vector.load %arg9[%c0_23, %c0_24] : memref<32x32xf32, #tpu.memory_space<vmem>>, vector<32x32xf32>
    %c0_25 = arith.constant 0 : index
    %c0_26 = arith.constant 0 : index
    %32 = vector.load %arg10[%c0_25, %c0_26] : memref<1x32xf32, #tpu.memory_space<vmem>>, vector<1x32xf32>
    %c0_27 = arith.constant 0 : index
    %c0_28 = arith.constant 0 : index
    %33 = vector.load %arg11[%c0_27, %c0_28] : memref<32x32xf32, #tpu.memory_space<vmem>>, vector<32x32xf32>
    %c0_29 = arith.constant 0 : index
    %c0_30 = arith.constant 0 : index
    %34 = vector.load %arg12[%c0_29, %c0_30] : memref<1x32xf32, #tpu.memory_space<vmem>>, vector<1x32xf32>
    %cst_31 = arith.constant dense<0.000000e+00> : vector<32x32xf32>
    %35 = tpu.matmul %30, %31, %cst_31 {dimension_numbers = #tpu.dot_dimension_numbers<[1], [0], [0], [1], [0, 0, 1, 1], [], []>} : vector<32x32xf32>, vector<32x32xf32>, vector<32x32xf32> -> vector<32x32xf32>
    %36 = vector.broadcast %32 : vector<1x32xf32> to vector<32x32xf32>
    %37 = arith.addf %35, %36 : vector<32x32xf32>
    %cst_32 = arith.constant 0.000000e+00 : f32
    %38 = vector.broadcast %cst_32 : f32 to vector<32x32xf32>
    %39 = arith.maximumf %37, %38 : vector<32x32xf32>
    %cst_33 = arith.constant dense<0.000000e+00> : vector<32x32xf32>
    %40 = tpu.matmul %30, %33, %cst_33 {dimension_numbers = #tpu.dot_dimension_numbers<[1], [0], [0], [1], [0, 0, 1, 1], [], []>} : vector<32x32xf32>, vector<32x32xf32>, vector<32x32xf32> -> vector<32x32xf32>
    %41 = vector.broadcast %34 : vector<1x32xf32> to vector<32x32xf32>
    %42 = arith.addf %40, %41 : vector<32x32xf32>
    %cst_34 = arith.constant 0.000000e+00 : f32
    %43 = vector.broadcast %cst_34 : f32 to vector<32x32xf32>
    %44 = arith.subf %43, %42 : vector<32x32xf32>
    %45 = math.exp %44 : vector<32x32xf32>
    %cst_35 = arith.constant 1.000000e+00 : f32
    %46 = vector.broadcast %cst_35 : f32 to vector<32x32xf32>
    %47 = arith.addf %46, %45 : vector<32x32xf32>
    %cst_36 = arith.constant 1.000000e+00 : f32
    %48 = vector.broadcast %cst_36 : f32 to vector<32x32xf32>
    %49 = arith.divf %48, %47 : vector<32x32xf32>
    %50 = arith.mulf %49, %39 : vector<32x32xf32>
    %cst_37 = arith.constant 1.000000e+00 : f32
    %51 = vector.broadcast %cst_37 : f32 to vector<32x32xf32>
    %52 = arith.subf %51, %49 : vector<32x32xf32>
    %53 = arith.mulf %52, %30 : vector<32x32xf32>
    %54 = arith.addf %50, %53 : vector<32x32xf32>
    %c0_38 = arith.constant 0 : index
    %c0_39 = arith.constant 0 : index
    %55 = vector.load %arg13[%c0_38, %c0_39] : memref<32x32xf32, #tpu.memory_space<vmem>>, vector<32x32xf32>
    tpu.vector_store %arg13[%c0_38, %c0_39], %54 {strides = array<i32>} : memref<32x32xf32, #tpu.memory_space<vmem>>, vector<32x32xf32>,
    return
  }
  func.func @transform_0(%arg0: i32) -> (i32, i32) {
    %c0_i32 = arith.constant 0 : i32
    %c0_i32_0 = arith.constant 0 : i32
    return %arg0, %c0_i32 : i32, i32
  }
  func.func @transform_1(%arg0: i32) -> (i32, i32) {
    %c0_i32 = arith.constant 0 : i32
    %c0_i32_0 = arith.constant 0 : i32
    return %arg0, %c0_i32 : i32, i32
  }
  func.func @transform_2(%arg0: i32) -> (i32, i32) {
    %c0_i32 = arith.constant 0 : i32
    %c0_i32_0 = arith.constant 0 : i32
    %c0_i32_1 = arith.constant 0 : i32
    return %c0_i32, %c0_i32_0 : i32, i32
  }
  func.func @transform_3(%arg0: i32) -> (i32, i32) {
    %c0_i32 = arith.constant 0 : i32
    %c0_i32_0 = arith.constant 0 : i32
    %c0_i32_1 = arith.constant 0 : i32
    return %c0_i32, %c0_i32_0 : i32, i32
  }
  func.func @transform_4(%arg0: i32) -> (i32, i32) {
    %c0_i32 = arith.constant 0 : i32
    %c0_i32_0 = arith.constant 0 : i32
    %c0_i32_1 = arith.constant 0 : i32
    return %c0_i32, %c0_i32_0 : i32, i32
  }
  func.func @transform_5(%arg0: i32) -> (i32, i32) {
    %c0_i32 = arith.constant 0 : i32
    %c0_i32_0 = arith.constant 0 : i32
    %c0_i32_1 = arith.constant 0 : i32
    return %c0_i32, %c0_i32_0 : i32, i32
  }
  func.func @transform_6(%arg0: i32) -> (i32, i32) {
    %c0_i32 = arith.constant 0 : i32
    %c0_i32_0 = arith.constant 0 : i32
    %c0_i32_1 = arith.constant 0 : i32
    return %c0_i32, %c0_i32_0 : i32, i32
  }
  func.func @transform_7(%arg0: i32) -> (i32, i32) {
    %c0_i32 = arith.constant 0 : i32
    %c0_i32_0 = arith.constant 0 : i32
    %c0_i32_1 = arith.constant 0 : i32
    return %c0_i32, %c0_i32_0 : i32, i32
  }
  func.func @transform_8(%arg0: i32) -> (i32, i32) {
    %c0_i32 = arith.constant 0 : i32
    %c0_i32_0 = arith.constant 0 : i32
    %c0_i32_1 = arith.constant 0 : i32
    return %c0_i32, %c0_i32_0 : i32, i32
  }
  func.func @transform_9(%arg0: i32) -> (i32, i32) {
    %c0_i32 = arith.constant 0 : i32
    %c0_i32_0 = arith.constant 0 : i32
    %c0_i32_1 = arith.constant 0 : i32
    return %c0_i32, %c0_i32_0 : i32, i32
  }
  func.func @transform_10(%arg0: i32) -> (i32, i32) {
    %c0_i32 = arith.constant 0 : i32
    %c0_i32_0 = arith.constant 0 : i32
    %c0_i32_1 = arith.constant 0 : i32
    return %c0_i32, %c0_i32_0 : i32, i32
  }
  func.func @transform_11(%arg0: i32) -> (i32, i32) {
    %c0_i32 = arith.constant 0 : i32
    %c0_i32_0 = arith.constant 0 : i32
    %c0_i32_1 = arith.constant 0 : i32
    return %c0_i32, %c0_i32_0 : i32, i32
  }
  func.func @transform_12(%arg0: i32) -> (i32, i32) {
    %c0_i32 = arith.constant 0 : i32
    %c0_i32_0 = arith.constant 0 : i32
    return %arg0, %c0_i32 : i32, i32
  }
}

</mosaic_0001>

<llo_original>
// kernel: tpu_custom_call.1
$region0: #{tpu_custom_call.1}
  #allocation0 [shape = 'u32[]', space=smem, size = 0x4, offset = 0x4, fixed_abs, tag = 'smem constant byte address 0x4 - core index']
  #allocation1 [shape = 'u32[144,128]{1,0:T(1,128)}', space=vmem, size = 0x12000, scoped, tag = 'internal scratch']
  %s0 = inlined_call_operand.vmem [shape: f32[32,32], index: 0, kind: input, shape index: {}]
  %s1 = inlined_call_operand.vmem [shape: f32[32,128], index: 1, kind: input, shape index: {}]
  %s2 = inlined_call_operand.vmem [shape: f32[32,32], index: 2, kind: input, shape index: {}]
  %s3 = inlined_call_operand.vmem [shape: f32[128,32], index: 3, kind: input, shape index: {}]
  %s4 = inlined_call_operand.vmem [shape: f32[32,32], index: 4, kind: input, shape index: {}]
  %s5 = inlined_call_operand.vmem [shape: f32[1,32], index: 5, kind: input, shape index: {}]
  %s6 = inlined_call_operand.vmem [shape: f32[32,32], index: 6, kind: input, shape index: {}]
  %s7 = inlined_call_operand.vmem [shape: f32[1,32], index: 7, kind: input, shape index: {}]
  %s8 = inlined_call_operand.hbm [shape: f32[32,32], index: 8, kind: input, shape index: {}]
  %s9 = inlined_call_operand.vmem [shape: f32[1,32], index: 9, kind: input, shape index: {}]
  %s10 = inlined_call_operand.hbm [shape: f32[32,32], index: 10, kind: input, shape index: {}]
  %s11 = inlined_call_operand.vmem [shape: f32[1,32], index: 11, kind: input, shape index: {}]
  %s12 = inlined_call_operand.hbm [shape: f32[32,32], index: 12, kind: output, shape index: {}]
  %s13 = sld [smem:[#allocation0]]
  $region66: #{tpu_custom_call.1} parent=0
    _
  %s15 = ssub.s32 1, %s13
  %s16 = scalar_select 0, %s15, %s13
  $region1: #{tpu_custom_call.1} parent=0
    #allocation2 [shape = 'u8[16384]{0}', space=vmem, size = 0x4000, scoped, tag = 'input window, operand 8, single buffered']
    #allocation3 [shape = 's32[1]{0}', space=sflag, size = 0x4, scoped, tag = 'scoped memory for tpu_custom_call.1']
    #allocation4 [shape = 's32[1]{0}', space=sflag, size = 0x4, scoped, tag = 'scoped memory for tpu_custom_call.1']
    #allocation5 [shape = 'u8[16384]{0}', space=vmem, size = 0x4000, scoped, tag = 'input window, operand 10, single buffered']
    #allocation6 [shape = 's32[1]{0}', space=sflag, size = 0x4, scoped, tag = 'scoped memory for tpu_custom_call.1']
    #allocation7 [shape = 'u8[16384]{0}', space=vmem, size = 0x4000, scoped, tag = 'output window, operand 0, single buffered']
    %17 = vsyncpa [#allocation3], 0
    %18 = vsyncpa [#allocation6], 0
    %19 = vsyncpa [#allocation4], 0
    // Predicated region
    $region2: #{tpu_custom_call.1} parent=1 // pred_check
      _
    $region3: #{tpu_custom_call.1} parent=1 // pred_check_branch
      %21 = sbr.rel (0) target = $region5
    $region4: #{tpu_custom_call.1} parent=1 // pred_region
      _
    $region5: #{tpu_custom_call.1} parent=1 // pred_fallthru
      _
    // Predicated region
    $region6: #{tpu_custom_call.1} parent=1 // pred_check
      _
    $region7: #{tpu_custom_call.1} parent=1 // pred_check_branch
      %23 = sbr.rel (0) target = $region9
    $region8: #{tpu_custom_call.1} parent=1 // pred_region
      _
    $region9: #{tpu_custom_call.1} parent=1 // pred_fallthru
      _
    // Predicated region
    $region10: #{tpu_custom_call.1} parent=1 // pred_check
      _
    $region11: #{tpu_custom_call.1} parent=1 // pred_check_branch
      %25 = sbr.rel (0) target = $region13
    $region12: #{tpu_custom_call.1} parent=1 // pred_region
      _
    $region13: #{tpu_custom_call.1} parent=1 // pred_fallthru
      _
    // Predicated region
    $region14: #{tpu_custom_call.1} parent=1 // pred_check
      _
    $region15: #{tpu_custom_call.1} parent=1 // pred_check_branch
      %27 = sbr.rel (0) target = $region17
    $region16: #{tpu_custom_call.1} parent=1 // pred_region
      _
    $region17: #{tpu_custom_call.1} parent=1 // pred_fallthru
      _
    // Predicated region
    $region18: #{tpu_custom_call.1} parent=1 // pred_check
      _
    $region19: #{tpu_custom_call.1} parent=1 // pred_check_branch
      %29 = sbr.rel (0) target = $region21
    $region20: #{tpu_custom_call.1} parent=1 // pred_region
      _
    $region21: #{tpu_custom_call.1} parent=1 // pred_fallthru
      _
    // Predicated region
    $region22: #{tpu_custom_call.1} parent=1 // pred_check
      _
    $region23: #{tpu_custom_call.1} parent=1 // pred_check_branch
      %31 = sbr.rel (0) target = $region25
    $region24: #{tpu_custom_call.1} parent=1 // pred_region
      _
    $region25: #{tpu_custom_call.1} parent=1 // pred_fallthru
      _
    // Predicated region
    $region26: #{tpu_custom_call.1} parent=1 // pred_check
      _
    $region27: #{tpu_custom_call.1} parent=1 // pred_check_branch
      %33 = sbr.rel (0) target = $region29
    $region28: #{tpu_custom_call.1} parent=1 // pred_region
      _
    $region29: #{tpu_custom_call.1} parent=1 // pred_fallthru
      _
    // Predicated region
    $region30: #{tpu_custom_call.1} parent=1 // pred_check
      _
    $region31: #{tpu_custom_call.1} parent=1 // pred_check_branch
      %35 = sbr.rel (0) target = $region33
    $region32: #{tpu_custom_call.1} parent=1 // pred_region
      _
    $region33: #{tpu_custom_call.1} parent=1 // pred_fallthru
      _
    // Predicated region
    $region34: #{tpu_custom_call.1} parent=1 // pred_check
      _
    $region35: #{tpu_custom_call.1} parent=1 // pred_check_branch
      %37 = sbr.rel (0) target = $region37
    $region36: #{tpu_custom_call.1} parent=1 // pred_region
      %s39 = ssub.s32 512, 512
      %40 = vsyncadd [#allocation3], %s39
      %s41 = sshll.u32 [#allocation2], 4
      %s42 = int_to_ptr.vmem [resolvable:$true] %s41
      %47 = dma.hbm_to_vmem [thread:$0]  %s8, 512, %s42, [#allocation3], 128, 128, 8
    $region37: #{tpu_custom_call.1} parent=1 // pred_fallthru
      _
    // Predicated region
    $region38: #{tpu_custom_call.1} parent=1 // pred_check
      _
    $region39: #{tpu_custom_call.1} parent=1 // pred_check_branch
      %49 = sbr.rel (0) target = $region41
    $region40: #{tpu_custom_call.1} parent=1 // pred_region
      _
    $region41: #{tpu_custom_call.1} parent=1 // pred_fallthru
      _
    // Predicated region
    $region42: #{tpu_custom_call.1} parent=1 // pred_check
      _
    $region43: #{tpu_custom_call.1} parent=1 // pred_check_branch
      %51 = sbr.rel (0) target = $region45
    $region44: #{tpu_custom_call.1} parent=1 // pred_region
      %s53 = ssub.s32 512, 512
      %54 = vsyncadd [#allocation6], %s53
      %s55 = sshll.u32 [#allocation5], 4
      %s56 = int_to_ptr.vmem [resolvable:$true] %s55
      %61 = dma.hbm_to_vmem [thread:$0]  %s10, 512, %s56, [#allocation6], 128, 128, 8
    $region45: #{tpu_custom_call.1} parent=1 // pred_fallthru
      _
    // Predicated region
    $region46: #{tpu_custom_call.1} parent=1 // pred_check
      _
    $region47: #{tpu_custom_call.1} parent=1 // pred_check_branch
      %63 = sbr.rel (0) target = $region49
    $region48: #{tpu_custom_call.1} parent=1 // pred_region
      _
    $region49: #{tpu_custom_call.1} parent=1 // pred_fallthru
      _
    // Predicated region
    $region50: #{tpu_custom_call.1} parent=1 // pred_check
      _
    $region51: #{tpu_custom_call.1} parent=1 // pred_check_branch
      %65 = sbr.rel (0) target = $region53
    $region52: #{tpu_custom_call.1} parent=1 // pred_region
      %66 = dma.done [#allocation3], 512
    $region53: #{tpu_custom_call.1} parent=1 // pred_fallthru
      _
    // Predicated region
    $region54: #{tpu_custom_call.1} parent=1 // pred_check
      _
    $region55: #{tpu_custom_call.1} parent=1 // pred_check_branch
      %68 = sbr.rel (0) target = $region57
    $region56: #{tpu_custom_call.1} parent=1 // pred_region
      %69 = dma.done [#allocation6], 512
    $region57: #{tpu_custom_call.1} parent=1 // pred_fallthru
      _
    %v70 = vld [vmem:[%s0] sm:$0xff]
    %v71 = vld [vmem:[%s0 + $0x8] sm:$0xff]
    %v72 = vld [vmem:[%s0 + $0x10] sm:$0xff]
    %v73 = vld [vmem:[%s0 + $0x18] sm:$0xff]
    %v74 = vld [vmem:[%s1] sm:$0xff]
    %v75 = vld [vmem:[%s1 + $0x8] sm:$0xff]
    %v76 = vld [vmem:[%s1 + $0x10] sm:$0xff]
    %v77 = vld [vmem:[%s1 + $0x18] sm:$0xff]
    %v78 = vld [vmem:[%s2] sm:$0xff]
    %v79 = vld [vmem:[%s2 + $0x8] sm:$0xff]
    %v80 = vld [vmem:[%s2 + $0x10] sm:$0xff]
    %v81 = vld [vmem:[%s2 + $0x18] sm:$0xff]
    %v82 = vld [vmem:[%s3] sm:$0xff]
    %v83 = vld [vmem:[%s3 + $0x8] sm:$0xff]
    %v84 = vld [vmem:[%s3 + $0x10] sm:$0xff]
    %v85 = vld [vmem:[%s3 + $0x18] sm:$0xff]
    %v86 = vld [vmem:[%s3 + $0x20] sm:$0xff]
    %v87 = vld [vmem:[%s3 + $0x28] sm:$0xff]
    %v88 = vld [vmem:[%s3 + $0x30] sm:$0xff]
    %v89 = vld [vmem:[%s3 + $0x38] sm:$0xff]
    %v90 = vld [vmem:[%s3 + $0x40] sm:$0xff]
    %v91 = vld [vmem:[%s3 + $0x48] sm:$0xff]
    %v92 = vld [vmem:[%s3 + $0x50] sm:$0xff]
    %v93 = vld [vmem:[%s3 + $0x58] sm:$0xff]
    %v94 = vld [vmem:[%s3 + $0x60] sm:$0xff]
    %v95 = vld [vmem:[%s3 + $0x68] sm:$0xff]
    %v96 = vld [vmem:[%s3 + $0x70] sm:$0xff]
    %v97 = vld [vmem:[%s3 + $0x78] sm:$0xff]
    %98 = vmatprep.subr.mxu0 0.0
    %99 = vmatpush1.msra.mxu0 %v97
    %100 = vmatprep.subr.mxu0 0.0
    %101 = vmatpush1.msra.mxu0 %v96
    %102 = vmatprep.subr.mxu0 0.0
    %103 = vmatpush1.msra.mxu0 %v95
    %104 = vmatprep.subr.mxu0 0.0
    %105 = vmatpush1.msra.mxu0 %v94
    %106 = vmatprep.subr.mxu0 0.0
    %107 = vmatpush1.msra.mxu0 %v93
    %108 = vmatprep.subr.mxu0 0.0
    %109 = vmatpush1.msra.mxu0 %v92
    %110 = vmatprep.subr.mxu0 0.0
    %111 = vmatpush1.msra.mxu0 %v91
    %112 = vmatprep.subr.mxu0 0.0
    %113 = vmatpush1.msra.mxu0 %v90
    %114 = vmatprep.subr.mxu0 0.0
    %115 = vmatpush1.msra.mxu0 %v89
    %116 = vmatprep.subr.mxu0 0.0
    %117 = vmatpush1.msra.mxu0 %v88
    %118 = vmatprep.subr.mxu0 0.0
    %119 = vmatpush1.msra.mxu0 %v87
    %120 = vmatprep.subr.mxu0 0.0
    %121 = vmatpush1.msra.mxu0 %v86
    %122 = vmatprep.subr.mxu0 0.0
    %123 = vmatpush1.msra.mxu0 %v85
    %124 = vmatprep.subr.mxu0 0.0
    %125 = vmatpush1.msra.mxu0 %v84
    %126 = vmatprep.subr.mxu0 0.0
    %127 = vmatpush1.msra.mxu0 %v83
    %128 = vmatprep.subr.mxu0 0.0
    %129 = vmatpush1.msra.mxu0 %v82
    %130 = vmatprep.subr.mxu0 0.0
    %131 = vmatpush2.msra.mxu0 0.0
    %132 = vmatprep.subr.mxu0 0.0
    %133 = vmatpush2.msra.mxu0 0.0
    %134 = vmatprep.subr.mxu0 0.0
    %135 = vmatpush2.msra.mxu0 0.0
    %136 = vmatprep.subr.mxu0 0.0
    %137 = vmatpush2.msra.mxu0 0.0
    %138 = vmatprep.subr.mxu0 0.0
    %139 = vmatpush2.msra.mxu0 0.0
    %140 = vmatprep.subr.mxu0 0.0
    %141 = vmatpush2.msra.mxu0 0.0
    %142 = vmatprep.subr.mxu0 0.0
    %143 = vmatpush2.msra.mxu0 0.0
    %144 = vmatprep.subr.mxu0 0.0
    %145 = vmatpush2.msra.mxu0 0.0
    %146 = vmatprep.subr.mxu0 0.0
    %147 = vmatpush2.msra.mxu0 0.0
    %148 = vmatprep.subr.mxu0 0.0
    %149 = vmatpush2.msra.mxu0 0.0
    %150 = vmatprep.subr.mxu0 0.0
    %151 = vmatpush2.msra.mxu0 0.0
    %152 = vmatprep.subr.mxu0 0.0
    %153 = vmatpush2.msra.mxu0 0.0
    %154 = vmatprep.subr.mxu0 0.0
    %155 = vmatpush2.msra.mxu0 0.0
    %156 = vmatprep.subr.mxu0 0.0
    %157 = vmatpush2.msra.mxu0 0.0
    %158 = vmatprep.subr.mxu0 0.0
    %159 = vmatpush2.msra.mxu0 0.0
    %160 = vmatprep.subr.mxu0 0.0
    %161 = vmatpush2.msra.mxu0 0.0
    %162 = vmatprep.mubr.f32.mxu0 0.0
    %163 = vmatmul.mubr.f32.gmra.mxu0 %v74
    %v164 = vpop.f32.mrf.mxu0
    %v165 = vadd.f32 0.0, %v164
    %v166 = vpop.f32.mrf.mxu0
    %167 = vmatprep.mubr.f32.mxu0 0.0
    %168 = vmatmul.mubr.f32.gmra.mxu0 %v75
    %v169 = vpop.f32.mrf.mxu0
    %v170 = vadd.f32 0.0, %v169
    %v171 = vpop.f32.mrf.mxu0
    %172 = vmatprep.mubr.f32.mxu0 0.0
    %173 = vmatmul.mubr.f32.gmra.mxu0 %v76
    %v174 = vpop.f32.mrf.mxu0
    %v175 = vadd.f32 0.0, %v174
    %v176 = vpop.f32.mrf.mxu0
    %177 = vmatprep.mubr.f32.mxu0 0.0
    %178 = vmatmul.mubr.f32.gmra.mxu0 %v77
    %v179 = vpop.f32.mrf.mxu0
    %v180 = vadd.f32 0.0, %v179
    %v181 = vpop.f32.mrf.mxu0
    %182 = vdwg.mxu0
    %vm183 = vcmask 261120
    %v185 = vsel %vm183, %v70, 0
    %v188 = vsel %vm183, %v71, 0
    %v191 = vsel %vm183, %v72, 0
    %v194 = vsel %vm183, %v73, 0
    %196 = vmatprep.subr.mxu0 0.0
    %197 = vmatpush1.msra.mxu0 0.0
    %198 = vmatprep.subr.mxu0 0.0
    %199 = vmatpush1.msra.mxu0 0.0
    %200 = vmatprep.subr.mxu0 0.0
    %201 = vmatpush1.msra.mxu0 0.0
    %202 = vmatprep.subr.mxu0 0.0
    %203 = vmatpush1.msra.mxu0 0.0
    %204 = vmatprep.subr.mxu0 0.0
    %205 = vmatpush1.msra.mxu0 0.0
    %206 = vmatprep.subr.mxu0 0.0
    %207 = vmatpush1.msra.mxu0 0.0
    %208 = vmatprep.subr.mxu0 0.0
    %209 = vmatpush1.msra.mxu0 0.0
    %210 = vmatprep.subr.mxu0 0.0
    %211 = vmatpush1.msra.mxu0 0.0
    %212 = vmatprep.subr.mxu0 0.0
    %213 = vmatpush1.msra.mxu0 0.0
    %214 = vmatprep.subr.mxu0 0.0
    %215 = vmatpush1.msra.mxu0 0.0
    %216 = vmatprep.subr.mxu0 0.0
    %217 = vmatpush1.msra.mxu0 0.0
    %218 = vmatprep.subr.mxu0 0.0
    %219 = vmatpush1.msra.mxu0 0.0
    %220 = vmatprep.subr.mxu0 0.0
    %221 = vmatpush1.msra.mxu0 %v81
    %222 = vmatprep.subr.mxu0 0.0
    %223 = vmatpush1.msra.mxu0 %v80
    %224 = vmatprep.subr.mxu0 0.0
    %225 = vmatpush1.msra.mxu0 %v79
    %226 = vmatprep.subr.mxu0 0.0
    %227 = vmatpush1.msra.mxu0 %v78
    %228 = vmatprep.subr.mxu0 0.0
    %229 = vmatpush2.msra.mxu0 0.0
    %230 = vmatprep.subr.mxu0 0.0
    %231 = vmatpush2.msra.mxu0 0.0
    %232 = vmatprep.subr.mxu0 0.0
    %233 = vmatpush2.msra.mxu0 0.0
    %234 = vmatprep.subr.mxu0 0.0
    %235 = vmatpush2.msra.mxu0 0.0
    %236 = vmatprep.subr.mxu0 0.0
    %237 = vmatpush2.msra.mxu0 0.0
    %238 = vmatprep.subr.mxu0 0.0
    %239 = vmatpush2.msra.mxu0 0.0
    %240 = vmatprep.subr.mxu0 0.0
    %241 = vmatpush2.msra.mxu0 0.0
    %242 = vmatprep.subr.mxu0 0.0
    %243 = vmatpush2.msra.mxu0 0.0
    %244 = vmatprep.subr.mxu0 0.0
    %245 = vmatpush2.msra.mxu0 0.0
    %246 = vmatprep.subr.mxu0 0.0
    %247 = vmatpush2.msra.mxu0 0.0
    %248 = vmatprep.subr.mxu0 0.0
    %249 = vmatpush2.msra.mxu0 0.0
    %250 = vmatprep.subr.mxu0 0.0
    %251 = vmatpush2.msra.mxu0 0.0
    %252 = vmatprep.subr.mxu0 0.0
    %253 = vmatpush2.msra.mxu0 0.0
    %254 = vmatprep.subr.mxu0 0.0
    %255 = vmatpush2.msra.mxu0 0.0
    %256 = vmatprep.subr.mxu0 0.0
    %257 = vmatpush2.msra.mxu0 0.0
    %258 = vmatprep.subr.mxu0 0.0
    %259 = vmatpush2.msra.mxu0 0.0
    %260 = vmatprep.mubr.f32.mxu0 0.0
    %261 = vmatmul.mubr.f32.gmra.mxu0 %v185
    %v262 = vpop.f32.mrf.mxu0
    %v263 = vadd.f32 %v165, %v262
    %v264 = vpop.f32.mrf.mxu0
    %265 = vmatprep.mubr.f32.mxu0 0.0
    %266 = vmatmul.mubr.f32.gmra.mxu0 %v188
    %v267 = vpop.f32.mrf.mxu0
    %v268 = vadd.f32 %v170, %v267
    %v269 = vpop.f32.mrf.mxu0
    %270 = vmatprep.mubr.f32.mxu0 0.0
    %271 = vmatmul.mubr.f32.gmra.mxu0 %v191
    %v272 = vpop.f32.mrf.mxu0
    %v273 = vadd.f32 %v175, %v272
    %v274 = vpop.f32.mrf.mxu0
    %275 = vmatprep.mubr.f32.mxu0 0.0
    %276 = vmatmul.mubr.f32.gmra.mxu0 %v194
    %v277 = vpop.f32.mrf.mxu0
    %v278 = vadd.f32 %v180, %v277
    %v279 = vpop.f32.mrf.mxu0
    %280 = vdwg.mxu0
    %v281 = vld [vmem:[%s4] sm:$0xff]
    %v282 = vld [vmem:[%s4 + $0x8] sm:$0xff]
    %v283 = vld [vmem:[%s4 + $0x10] sm:$0xff]
    %v284 = vld [vmem:[%s4 + $0x18] sm:$0xff]
    %v285 = vld [vmem:[%s5] sm:$0x1]
    %v286 = vld [vmem:[%s6] sm:$0xff]
    %v287 = vld [vmem:[%s6 + $0x8] sm:$0xff]
    %v288 = vld [vmem:[%s6 + $0x10] sm:$0xff]
    %v289 = vld [vmem:[%s6 + $0x18] sm:$0xff]
    %v290 = vld [vmem:[%s7] sm:$0x1]
    %v292 = vlaneseq
    %v293 = vshrl.u32 %v292, 7
    %v294 = vsub.s32 0, %v293
    %v295 = vrot.slane %v285, %v294
    %v298 = vsel %vm183, %v263, 0
    %v301 = vsel %vm183, %v268, 0
    %v304 = vsel %vm183, %v273, 0
    %v307 = vsel %vm183, %v278, 0
    %309 = vmatprep.subr.mxu0 0.0
    %310 = vmatpush1.msra.mxu0 0.0
    %311 = vmatprep.subr.mxu0 0.0
    %312 = vmatpush1.msra.mxu0 0.0
    %313 = vmatprep.subr.mxu0 0.0
    %314 = vmatpush1.msra.mxu0 0.0
    %315 = vmatprep.subr.mxu0 0.0
    %316 = vmatpush1.msra.mxu0 0.0
    %317 = vmatprep.subr.mxu0 0.0
    %318 = vmatpush1.msra.mxu0 0.0
    %319 = vmatprep.subr.mxu0 0.0
    %320 = vmatpush1.msra.mxu0 0.0
    %321 = vmatprep.subr.mxu0 0.0
    %322 = vmatpush1.msra.mxu0 0.0
    %323 = vmatprep.subr.mxu0 0.0
    %324 = vmatpush1.msra.mxu0 0.0
    %325 = vmatprep.subr.mxu0 0.0
    %326 = vmatpush1.msra.mxu0 0.0
    %327 = vmatprep.subr.mxu0 0.0
    %328 = vmatpush1.msra.mxu0 0.0
    %329 = vmatprep.subr.mxu0 0.0
    %330 = vmatpush1.msra.mxu0 0.0
    %331 = vmatprep.subr.mxu0 0.0
    %332 = vmatpush1.msra.mxu0 0.0
    %333 = vmatprep.subr.mxu0 0.0
    %334 = vmatpush1.msra.mxu0 %v284
    %335 = vmatprep.subr.mxu0 0.0
    %336 = vmatpush1.msra.mxu0 %v283
    %337 = vmatprep.subr.mxu0 0.0
    %338 = vmatpush1.msra.mxu0 %v282
    %339 = vmatprep.subr.mxu0 0.0
    %340 = vmatpush1.msra.mxu0 %v281
    %341 = vmatprep.subr.mxu0 0.0
    %342 = vmatpush2.msra.mxu0 0.0
    %343 = vmatprep.subr.mxu0 0.0
    %344 = vmatpush2.msra.mxu0 0.0
    %345 = vmatprep.subr.mxu0 0.0
    %346 = vmatpush2.msra.mxu0 0.0
    %347 = vmatprep.subr.mxu0 0.0
    %348 = vmatpush2.msra.mxu0 0.0
    %349 = vmatprep.subr.mxu0 0.0
    %350 = vmatpush2.msra.mxu0 0.0
    %351 = vmatprep.subr.mxu0 0.0
    %352 = vmatpush2.msra.mxu0 0.0
    %353 = vmatprep.subr.mxu0 0.0
    %354 = vmatpush2.msra.mxu0 0.0
    %355 = vmatprep.subr.mxu0 0.0
    %356 = vmatpush2.msra.mxu0 0.0
    %357 = vmatprep.subr.mxu0 0.0
    %358 = vmatpush2.msra.mxu0 0.0
    %359 = vmatprep.subr.mxu0 0.0
    %360 = vmatpush2.msra.mxu0 0.0
    %361 = vmatprep.subr.mxu0 0.0
    %362 = vmatpush2.msra.mxu0 0.0
    %363 = vmatprep.subr.mxu0 0.0
    %364 = vmatpush2.msra.mxu0 0.0
    %365 = vmatprep.subr.mxu0 0.0
    %366 = vmatpush2.msra.mxu0 0.0
    %367 = vmatprep.subr.mxu0 0.0
    %368 = vmatpush2.msra.mxu0 0.0
    %369 = vmatprep.subr.mxu0 0.0
    %370 = vmatpush2.msra.mxu0 0.0
    %371 = vmatprep.subr.mxu0 0.0
    %372 = vmatpush2.msra.mxu0 0.0
    %373 = vmatprep.mubr.f32.mxu0 0.0
    %374 = vmatmul.mubr.f32.gmra.mxu0 %v298
    %v375 = vpop.f32.mrf.mxu0
    %v376 = vadd.f32 %v295, %v375
    %v377 = vpop.f32.mrf.mxu0
    %378 = vmatprep.mubr.f32.mxu0 0.0
    %379 = vmatmul.mubr.f32.gmra.mxu0 %v301
    %v380 = vpop.f32.mrf.mxu0
    %v381 = vadd.f32 %v295, %v380
    %v382 = vpop.f32.mrf.mxu0
    %383 = vmatprep.mubr.f32.mxu0 0.0
    %384 = vmatmul.mubr.f32.gmra.mxu0 %v304
    %v385 = vpop.f32.mrf.mxu0
    %v386 = vadd.f32 %v295, %v385
    %v387 = vpop.f32.mrf.mxu0
    %388 = vmatprep.mubr.f32.mxu0 0.0
    %389 = vmatmul.mubr.f32.gmra.mxu0 %v307
    %v390 = vpop.f32.mrf.mxu0
    %v391 = vadd.f32 %v295, %v390
    %v392 = vpop.f32.mrf.mxu0
    %393 = vdwg.mxu0
    %v394 = vmax.f32 %v376, 0.0
    %v395 = vmax.f32 %v381, 0.0
    %v396 = vmax.f32 %v386, 0.0
    %v397 = vmax.f32 %v391, 0.0
    %v399 = vlaneseq
    %v400 = vshrl.u32 %v399, 7
    %v401 = vsub.s32 0, %v400
    %v402 = vrot.slane %v290, %v401
    %404 = vmatprep.subr.mxu0 0.0
    %405 = vmatpush1.msra.mxu0 0.0
    %406 = vmatprep.subr.mxu0 0.0
    %407 = vmatpush1.msra.mxu0 0.0
    %408 = vmatprep.subr.mxu0 0.0
    %409 = vmatpush1.msra.mxu0 0.0
    %410 = vmatprep.subr.mxu0 0.0
    %411 = vmatpush1.msra.mxu0 0.0
    %412 = vmatprep.subr.mxu0 0.0
    %413 = vmatpush1.msra.mxu0 0.0
    %414 = vmatprep.subr.mxu0 0.0
    %415 = vmatpush1.msra.mxu0 0.0
    %416 = vmatprep.subr.mxu0 0.0
    %417 = vmatpush1.msra.mxu0 0.0
    %418 = vmatprep.subr.mxu0 0.0
    %419 = vmatpush1.msra.mxu0 0.0
    %420 = vmatprep.subr.mxu0 0.0
    %421 = vmatpush1.msra.mxu0 0.0
    %422 = vmatprep.subr.mxu0 0.0
    %423 = vmatpush1.msra.mxu0 0.0
    %424 = vmatprep.subr.mxu0 0.0
    %425 = vmatpush1.msra.mxu0 0.0
    %426 = vmatprep.subr.mxu0 0.0
    %427 = vmatpush1.msra.mxu0 0.0
    %428 = vmatprep.subr.mxu0 0.0
    %429 = vmatpush1.msra.mxu0 %v289
    %430 = vmatprep.subr.mxu0 0.0
    %431 = vmatpush1.msra.mxu0 %v288
    %432 = vmatprep.subr.mxu0 0.0
    %433 = vmatpush1.msra.mxu0 %v287
    %434 = vmatprep.subr.mxu0 0.0
    %435 = vmatpush1.msra.mxu0 %v286
    %436 = vmatprep.subr.mxu0 0.0
    %437 = vmatpush2.msra.mxu0 0.0
    %438 = vmatprep.subr.mxu0 0.0
    %439 = vmatpush2.msra.mxu0 0.0
    %440 = vmatprep.subr.mxu0 0.0
    %441 = vmatpush2.msra.mxu0 0.0
    %442 = vmatprep.subr.mxu0 0.0
    %443 = vmatpush2.msra.mxu0 0.0
    %444 = vmatprep.subr.mxu0 0.0
    %445 = vmatpush2.msra.mxu0 0.0
    %446 = vmatprep.subr.mxu0 0.0
    %447 = vmatpush2.msra.mxu0 0.0
    %448 = vmatprep.subr.mxu0 0.0
    %449 = vmatpush2.msra.mxu0 0.0
    %450 = vmatprep.subr.mxu0 0.0
    %451 = vmatpush2.msra.mxu0 0.0
    %452 = vmatprep.subr.mxu0 0.0
    %453 = vmatpush2.msra.mxu0 0.0
    %454 = vmatprep.subr.mxu0 0.0
    %455 = vmatpush2.msra.mxu0 0.0
    %456 = vmatprep.subr.mxu0 0.0
    %457 = vmatpush2.msra.mxu0 0.0
    %458 = vmatprep.subr.mxu0 0.0
    %459 = vmatpush2.msra.mxu0 0.0
    %460 = vmatprep.subr.mxu0 0.0
    %461 = vmatpush2.msra.mxu0 0.0
    %462 = vmatprep.subr.mxu0 0.0
    %463 = vmatpush2.msra.mxu0 0.0
    %464 = vmatprep.subr.mxu0 0.0
    %465 = vmatpush2.msra.mxu0 0.0
    %466 = vmatprep.subr.mxu0 0.0
    %467 = vmatpush2.msra.mxu0 0.0
    %468 = vmatprep.mubr.f32.mxu0 0.0
    %469 = vmatmul.mubr.f32.gmra.mxu0 %v298
    %v470 = vpop.f32.mrf.mxu0
    %v471 = vadd.f32 %v402, %v470
    %v472 = vpop.f32.mrf.mxu0
    %473 = vmatprep.mubr.f32.mxu0 0.0
    %474 = vmatmul.mubr.f32.gmra.mxu0 %v301
    %v475 = vpop.f32.mrf.mxu0
    %v476 = vadd.f32 %v402, %v475
    %v477 = vpop.f32.mrf.mxu0
    %478 = vmatprep.mubr.f32.mxu0 0.0
    %479 = vmatmul.mubr.f32.gmra.mxu0 %v304
    %v480 = vpop.f32.mrf.mxu0
    %v481 = vadd.f32 %v402, %v480
    %v482 = vpop.f32.mrf.mxu0
    %483 = vmatprep.mubr.f32.mxu0 0.0
    %484 = vmatmul.mubr.f32.gmra.mxu0 %v307
    %v485 = vpop.f32.mrf.mxu0
    %v486 = vadd.f32 %v402, %v485
    %v487 = vpop.f32.mrf.mxu0
    %488 = vdwg.mxu0
    %v489 = vsub.f32 0.0, %v471
    %v490 = vsub.f32 0.0, %v476
    %v491 = vsub.f32 0.0, %v481
    %v492 = vsub.f32 0.0, %v486
    %v493 = vmul.f32 %v489, 1.442695
    %v494 = vpow.pop %v493
    %v495 = vmul.f32 %v490, 1.442695
    %v496 = vpow.pop %v495
    %v497 = vmul.f32 %v491, 1.442695
    %v498 = vpow.pop %v497
    %v499 = vmul.f32 %v492, 1.442695
    %v500 = vpow.pop %v499
    %v501 = vadd.f32 %v494, 1.0
    %v502 = vadd.f32 %v496, 1.0
    %v503 = vadd.f32 %v498, 1.0
    %v504 = vadd.f32 %v500, 1.0
    %v505 = vrcp.pop %v501
    %v506 = vmul.f32 1.0, %v505
    %v507 = vrcp.pop %v502
    %v508 = vmul.f32 1.0, %v507
    %v509 = vrcp.pop %v503
    %v510 = vmul.f32 1.0, %v509
    %v511 = vrcp.pop %v504
    %v512 = vmul.f32 1.0, %v511
    %v513 = vmul.f32 %v506, %v394
    %v514 = vmul.f32 %v508, %v395
    %v515 = vmul.f32 %v510, %v396
    %v516 = vmul.f32 %v512, %v397
    %v517 = vsub.f32 1.0, %v506
    %v518 = vsub.f32 1.0, %v508
    %v519 = vsub.f32 1.0, %v510
    %v520 = vsub.f32 1.0, %v512
    %v521 = vmul.f32 %v517, %v263
    %v522 = vmul.f32 %v518, %v268
    %v523 = vmul.f32 %v519, %v273
    %v524 = vmul.f32 %v520, %v278
    %v525 = vadd.f32 %v513, %v521
    %v526 = vadd.f32 %v514, %v522
    %v527 = vadd.f32 %v515, %v523
    %v528 = vadd.f32 %v516, %v524
    %v529 = vld [vmem:[#allocation2] sm:$0xff]
    %v530 = vld [vmem:[#allocation2 + $0x8] sm:$0xff]
    %v531 = vld [vmem:[#allocation2 + $0x10] sm:$0xff]
    %v532 = vld [vmem:[#allocation2 + $0x18] sm:$0xff]
    %v533 = vld [vmem:[%s9] sm:$0x1]
    %v534 = vld [vmem:[#allocation5] sm:$0xff]
    %v535 = vld [vmem:[#allocation5 + $0x8] sm:$0xff]
    %v536 = vld [vmem:[#allocation5 + $0x10] sm:$0xff]
    %v537 = vld [vmem:[#allocation5 + $0x18] sm:$0xff]
    %v538 = vld [vmem:[%s11] sm:$0x1]
    %v540 = vlaneseq
    %v541 = vshrl.u32 %v540, 7
    %v542 = vsub.s32 0, %v541
    %v543 = vrot.slane %v533, %v542
    %v546 = vsel %vm183, %v525, 0
    %v549 = vsel %vm183, %v526, 0
    %v552 = vsel %vm183, %v527, 0
    %v555 = vsel %vm183, %v528, 0
    %557 = vmatprep.subr.mxu0 0.0
    %558 = vmatpush1.msra.mxu0 0.0
    %559 = vmatprep.subr.mxu0 0.0
    %560 = vmatpush1.msra.mxu0 0.0
    %561 = vmatprep.subr.mxu0 0.0
    %562 = vmatpush1.msra.mxu0 0.0
    %563 = vmatprep.subr.mxu0 0.0
    %564 = vmatpush1.msra.mxu0 0.0
    %565 = vmatprep.subr.mxu0 0.0
    %566 = vmatpush1.msra.mxu0 0.0
    %567 = vmatprep.subr.mxu0 0.0
    %568 = vmatpush1.msra.mxu0 0.0
    %569 = vmatprep.subr.mxu0 0.0
    %570 = vmatpush1.msra.mxu0 0.0
    %571 = vmatprep.subr.mxu0 0.0
    %572 = vmatpush1.msra.mxu0 0.0
    %573 = vmatprep.subr.mxu0 0.0
    %574 = vmatpush1.msra.mxu0 0.0
    %575 = vmatprep.subr.mxu0 0.0
    %576 = vmatpush1.msra.mxu0 0.0
    %577 = vmatprep.subr.mxu0 0.0
    %578 = vmatpush1.msra.mxu0 0.0
    %579 = vmatprep.subr.mxu0 0.0
    %580 = vmatpush1.msra.mxu0 0.0
    %581 = vmatprep.subr.mxu0 0.0
    %582 = vmatpush1.msra.mxu0 %v532
    %583 = vmatprep.subr.mxu0 0.0
    %584 = vmatpush1.msra.mxu0 %v531
    %585 = vmatprep.subr.mxu0 0.0
    %586 = vmatpush1.msra.mxu0 %v530
    %587 = vmatprep.subr.mxu0 0.0
    %588 = vmatpush1.msra.mxu0 %v529
    %589 = vmatprep.subr.mxu0 0.0
    %590 = vmatpush2.msra.mxu0 0.0
    %591 = vmatprep.subr.mxu0 0.0
    %592 = vmatpush2.msra.mxu0 0.0
    %593 = vmatprep.subr.mxu0 0.0
    %594 = vmatpush2.msra.mxu0 0.0
    %595 = vmatprep.subr.mxu0 0.0
    %596 = vmatpush2.msra.mxu0 0.0
    %597 = vmatprep.subr.mxu0 0.0
    %598 = vmatpush2.msra.mxu0 0.0
    %599 = vmatprep.subr.mxu0 0.0
    %600 = vmatpush2.msra.mxu0 0.0
    %601 = vmatprep.subr.mxu0 0.0
    %602 = vmatpush2.msra.mxu0 0.0
    %603 = vmatprep.subr.mxu0 0.0
    %604 = vmatpush2.msra.mxu0 0.0
    %605 = vmatprep.subr.mxu0 0.0
    %606 = vmatpush2.msra.mxu0 0.0
    %607 = vmatprep.subr.mxu0 0.0
    %608 = vmatpush2.msra.mxu0 0.0
    %609 = vmatprep.subr.mxu0 0.0
    %610 = vmatpush2.msra.mxu0 0.0
    %611 = vmatprep.subr.mxu0 0.0
    %612 = vmatpush2.msra.mxu0 0.0
    %613 = vmatprep.subr.mxu0 0.0
    %614 = vmatpush2.msra.mxu0 0.0
    %615 = vmatprep.subr.mxu0 0.0
    %616 = vmatpush2.msra.mxu0 0.0
    %617 = vmatprep.subr.mxu0 0.0
    %618 = vmatpush2.msra.mxu0 0.0
    %619 = vmatprep.subr.mxu0 0.0
    %620 = vmatpush2.msra.mxu0 0.0
    %621 = vmatprep.mubr.f32.mxu0 0.0
    %622 = vmatmul.mubr.f32.gmra.mxu0 %v546
    %v623 = vpop.f32.mrf.mxu0
    %v624 = vadd.f32 %v543, %v623
    %v625 = vpop.f32.mrf.mxu0
    %626 = vmatprep.mubr.f32.mxu0 0.0
    %627 = vmatmul.mubr.f32.gmra.mxu0 %v549
    %v628 = vpop.f32.mrf.mxu0
    %v629 = vadd.f32 %v543, %v628
    %v630 = vpop.f32.mrf.mxu0
    %631 = vmatprep.mubr.f32.mxu0 0.0
    %632 = vmatmul.mubr.f32.gmra.mxu0 %v552
    %v633 = vpop.f32.mrf.mxu0
    %v634 = vadd.f32 %v543, %v633
    %v635 = vpop.f32.mrf.mxu0
    %636 = vmatprep.mubr.f32.mxu0 0.0
    %637 = vmatmul.mubr.f32.gmra.mxu0 %v555
    %v638 = vpop.f32.mrf.mxu0
    %v639 = vadd.f32 %v543, %v638
    %v640 = vpop.f32.mrf.mxu0
    %641 = vdwg.mxu0
    %v642 = vmax.f32 %v624, 0.0
    %v643 = vmax.f32 %v629, 0.0
    %v644 = vmax.f32 %v634, 0.0
    %v645 = vmax.f32 %v639, 0.0
    %v647 = vlaneseq
    %v648 = vshrl.u32 %v647, 7
    %v649 = vsub.s32 0, %v648
    %v650 = vrot.slane %v538, %v649
    %652 = vmatprep.subr.mxu0 0.0
    %653 = vmatpush1.msra.mxu0 0.0
    %654 = vmatprep.subr.mxu0 0.0
    %655 = vmatpush1.msra.mxu0 0.0
    %656 = vmatprep.subr.mxu0 0.0
    %657 = vmatpush1.msra.mxu0 0.0
    %658 = vmatprep.subr.mxu0 0.0
    %659 = vmatpush1.msra.mxu0 0.0
    %660 = vmatprep.subr.mxu0 0.0
    %661 = vmatpush1.msra.mxu0 0.0
    %662 = vmatprep.subr.mxu0 0.0
    %663 = vmatpush1.msra.mxu0 0.0
    %664 = vmatprep.subr.mxu0 0.0
    %665 = vmatpush1.msra.mxu0 0.0
    %666 = vmatprep.subr.mxu0 0.0
    %667 = vmatpush1.msra.mxu0 0.0
    %668 = vmatprep.subr.mxu0 0.0
    %669 = vmatpush1.msra.mxu0 0.0
    %670 = vmatprep.subr.mxu0 0.0
    %671 = vmatpush1.msra.mxu0 0.0
    %672 = vmatprep.subr.mxu0 0.0
    %673 = vmatpush1.msra.mxu0 0.0
    %674 = vmatprep.subr.mxu0 0.0
    %675 = vmatpush1.msra.mxu0 0.0
    %676 = vmatprep.subr.mxu0 0.0
    %677 = vmatpush1.msra.mxu0 %v537
    %678 = vmatprep.subr.mxu0 0.0
    %679 = vmatpush1.msra.mxu0 %v536
    %680 = vmatprep.subr.mxu0 0.0
    %681 = vmatpush1.msra.mxu0 %v535
    %682 = vmatprep.subr.mxu0 0.0
    %683 = vmatpush1.msra.mxu0 %v534
    %684 = vmatprep.subr.mxu0 0.0
    %685 = vmatpush2.msra.mxu0 0.0
    %686 = vmatprep.subr.mxu0 0.0
    %687 = vmatpush2.msra.mxu0 0.0
    %688 = vmatprep.subr.mxu0 0.0
    %689 = vmatpush2.msra.mxu0 0.0
    %690 = vmatprep.subr.mxu0 0.0
    %691 = vmatpush2.msra.mxu0 0.0
    %692 = vmatprep.subr.mxu0 0.0
    %693 = vmatpush2.msra.mxu0 0.0
    %694 = vmatprep.subr.mxu0 0.0
    %695 = vmatpush2.msra.mxu0 0.0
    %696 = vmatprep.subr.mxu0 0.0
    %697 = vmatpush2.msra.mxu0 0.0
    %698 = vmatprep.subr.mxu0 0.0
    %699 = vmatpush2.msra.mxu0 0.0
    %700 = vmatprep.subr.mxu0 0.0
    %701 = vmatpush2.msra.mxu0 0.0
    %702 = vmatprep.subr.mxu0 0.0
    %703 = vmatpush2.msra.mxu0 0.0
    %704 = vmatprep.subr.mxu0 0.0
    %705 = vmatpush2.msra.mxu0 0.0
    %706 = vmatprep.subr.mxu0 0.0
    %707 = vmatpush2.msra.mxu0 0.0
    %708 = vmatprep.subr.mxu0 0.0
    %709 = vmatpush2.msra.mxu0 0.0
    %710 = vmatprep.subr.mxu0 0.0
    %711 = vmatpush2.msra.mxu0 0.0
    %712 = vmatprep.subr.mxu0 0.0
    %713 = vmatpush2.msra.mxu0 0.0
    %714 = vmatprep.subr.mxu0 0.0
    %715 = vmatpush2.msra.mxu0 0.0
    %716 = vmatprep.mubr.f32.mxu0 0.0
    %717 = vmatmul.mubr.f32.gmra.mxu0 %v546
    %v718 = vpop.f32.mrf.mxu0
    %v719 = vadd.f32 %v650, %v718
    %v720 = vpop.f32.mrf.mxu0
    %721 = vmatprep.mubr.f32.mxu0 0.0
    %722 = vmatmul.mubr.f32.gmra.mxu0 %v549
    %v723 = vpop.f32.mrf.mxu0
    %v724 = vadd.f32 %v650, %v723
    %v725 = vpop.f32.mrf.mxu0
    %726 = vmatprep.mubr.f32.mxu0 0.0
    %727 = vmatmul.mubr.f32.gmra.mxu0 %v552
    %v728 = vpop.f32.mrf.mxu0
    %v729 = vadd.f32 %v650, %v728
    %v730 = vpop.f32.mrf.mxu0
    %731 = vmatprep.mubr.f32.mxu0 0.0
    %732 = vmatmul.mubr.f32.gmra.mxu0 %v555
    %v733 = vpop.f32.mrf.mxu0
    %v734 = vadd.f32 %v650, %v733
    %v735 = vpop.f32.mrf.mxu0
    %736 = vdwg.mxu0
    %v737 = vsub.f32 0.0, %v719
    %v738 = vsub.f32 0.0, %v724
    %v739 = vsub.f32 0.0, %v729
    %v740 = vsub.f32 0.0, %v734
    %v741 = vmul.f32 %v737, 1.442695
    %v742 = vpow.pop %v741
    %v743 = vmul.f32 %v738, 1.442695
    %v744 = vpow.pop %v743
    %v745 = vmul.f32 %v739, 1.442695
    %v746 = vpow.pop %v745
    %v747 = vmul.f32 %v740, 1.442695
    %v748 = vpow.pop %v747
    %v749 = vadd.f32 %v742, 1.0
    %v750 = vadd.f32 %v744, 1.0
    %v751 = vadd.f32 %v746, 1.0
    %v752 = vadd.f32 %v748, 1.0
    %v753 = vrcp.pop %v749
    %v754 = vmul.f32 1.0, %v753
    %v755 = vrcp.pop %v750
    %v756 = vmul.f32 1.0, %v755
    %v757 = vrcp.pop %v751
    %v758 = vmul.f32 1.0, %v757
    %v759 = vrcp.pop %v752
    %v760 = vmul.f32 1.0, %v759
    %v761 = vmul.f32 %v754, %v642
    %v762 = vmul.f32 %v756, %v643
    %v763 = vmul.f32 %v758, %v644
    %v764 = vmul.f32 %v760, %v645
    %v765 = vsub.f32 1.0, %v754
    %v766 = vsub.f32 1.0, %v756
    %v767 = vsub.f32 1.0, %v758
    %v768 = vsub.f32 1.0, %v760
    %v769 = vmul.f32 %v765, %v525
    %v770 = vmul.f32 %v766, %v526
    %v771 = vmul.f32 %v767, %v527
    %v772 = vmul.f32 %v768, %v528
    %v773 = vadd.f32 %v761, %v769
    %v774 = vadd.f32 %v762, %v770
    %v775 = vadd.f32 %v763, %v771
    %v776 = vadd.f32 %v764, %v772
    %777 = vst.msk [vmem:[#allocation7] sm:$0xff] %vm183, %v773
    %778 = vst.msk [vmem:[#allocation7 + $0x8] sm:$0xff] %vm183, %v774
    %779 = vst.msk [vmem:[#allocation7 + $0x10] sm:$0xff] %vm183, %v775
    %780 = vst.msk [vmem:[#allocation7 + $0x18] sm:$0xff] %vm183, %v776
    // Predicated region
    $region58: #{tpu_custom_call.1} parent=1 // pred_check
      _
    $region59: #{tpu_custom_call.1} parent=1 // pred_check_branch
      %782 = sbr.rel (0) target = $region61
    $region60: #{tpu_custom_call.1} parent=1 // pred_region
      %s784 = ssub.s32 512, 512
      %785 = vsyncadd [#allocation4], %s784
      %s786 = sshll.u32 [#allocation7], 4
      %s787 = int_to_ptr.vmem [resolvable:$true] %s786
      %792 = dma.vmem_to_hbm [thread:$0]  %s787, 512, %s12, [#allocation4], 128, 128, 8
    $region61: #{tpu_custom_call.1} parent=1 // pred_fallthru
      _
    // Predicated region
    $region62: #{tpu_custom_call.1} parent=1 // pred_check
      _
    $region63: #{tpu_custom_call.1} parent=1 // pred_check_branch
      %794 = sbr.rel (0) target = $region65
    $region64: #{tpu_custom_call.1} parent=1 // pred_region
      %795 = dma.done [#allocation4], 512
    $region65: #{tpu_custom_call.1} parent=1 // pred_fallthru
      _
    %796 = vsyncpa [#allocation3], 1
    %797 = vsyncpa [#allocation6], 1
    %798 = vsyncpa [#allocation4], 1

</llo_original>
